<compile_context>
chip_gen: v6e
topology: v6e:2x2x1
jax: 0.10.0
libtpu: 0.0.40
codegen_flags: <defaults>
</compile_context>

<pallas_src>
import jax
import jax.numpy as jnp
from jax.experimental import pallas as pl
from jax.experimental.pallas import tpu as pltpu

D_MODEL = 768     # d_models['roberta-base'] — lane-dense (multiple of 128)
VOCAB = 101       # 100 base tokens + 1 added '[quote]' token (resize_token_embeddings)
BATCH = 2
SEQ = 8


def _masked_sum_norm_kernel(lens_ref, hidden_ref, out_ref, acc_ref):
    """lens_ref: SMEM (B,) int32; hidden_ref: VMEM (TB, TS, D); out_ref: (TB, D); acc: (TB, D) f32."""
    bi = pl.program_id(0)                     # batch-tile index  ("parallel")
    si = pl.program_id(1)                     # seq-tile index    ("arbitrary" reduction)
    tb, ts, _ = hidden_ref.shape

    @pl.when(si == 0)
    def _():
        acc_ref[...] = jnp.zeros_like(acc_ref)

    # Rebuild the attention mask from scalar-prefetched lengths (no mask DMA stream).
    # lens -> (TB, 1, 1) int32 built from TB scalar SMEM reads via a tiny select chain.
    batch_iota = jax.lax.broadcasted_iota(jnp.int32, (tb, 1, 1), 0)
    lens = jnp.zeros((tb, 1, 1), jnp.int32)
    for j in range(tb):                                   # tb is small & static -> unrolled
        lens = jnp.where(batch_iota == j, lens_ref[bi * tb + j], lens)

    seq_pos = si * ts + jax.lax.broadcasted_iota(jnp.int32, (tb, ts, 1), 1)   # global seq position
    mask = seq_pos < lens                                                     # (TB, TS, 1) bool

    # Masked partial sum, accumulated in f32 (works unchanged for bf16 hidden states).
    h = hidden_ref[...].astype(jnp.float32)                                   # (TB, TS, D)
    masked = jnp.where(mask, h, 0.0)
    acc_ref[...] += jnp.sum(masked, axis=1)                                   # (TB, D)

    @pl.when(si == pl.num_programs(1) - 1)
    def _():
        s = acc_ref[...]
        sumsq = jnp.sum(s * s, axis=-1, keepdims=True)
        # rsqrt(max(sumsq, 1e-24)) == 1 / max(||s||, 1e-12)  (F.normalize eps semantics), on EUP.
        inv = jax.lax.rsqrt(jnp.maximum(sumsq, 1e-24))
        out_ref[...] = (s * inv).astype(out_ref.dtype)


def masked_sum_normalize(hidden, lengths, *, tb=8, ts=256, vmem_budget_per_buf=6 << 20):
    """hidden: (B, S, D) f32/bf16; lengths: (B,) int. Returns (B, D) in hidden.dtype."""
    B, S, D = hidden.shape
    tb = min(tb, B)
    ts = min(ts, S)
    # Cap the hidden tile so 2x double-buffered input + accumulator fits v7x's 64 MiB VMEM.
    while tb * ts * D * hidden.dtype.itemsize > vmem_budget_per_buf and ts > 8:
        ts //= 2
    assert B % tb == 0 and S % ts == 0, "wrapper assumes evenly divisible tiles"

    grid_spec = pltpu.PrefetchScalarGridSpec(
        num_scalar_prefetch=1,                           # lengths -> SMEM
        grid=(B // tb, S // ts),
        in_specs=[
            pl.BlockSpec((tb, ts, D), lambda bi, si, lens: (bi, si, 0)),
        ],
        # Same output block across the seq axis -> accumulator-resident reduction.
        out_specs=pl.BlockSpec((tb, D), lambda bi, si, lens: (bi, 0)),
        scratch_shapes=[pltpu.VMEM((tb, D), jnp.float32)],
    )
    return pl.pallas_call(
        _masked_sum_norm_kernel,
        out_shape=jax.ShapeDtypeStruct((B, D), hidden.dtype),
        grid_spec=grid_spec,
        compiler_params=pltpu.CompilerParams(
            dimension_semantics=("parallel", "arbitrary"),   # batch across TCs (v7x), seq = reduction
            vmem_limit_bytes=32 * 1024 * 1024,
        ),
    )(lengths.astype(jnp.int32), hidden)


def init_params(key):
    # Deterministic synthetic "token embedding" table standing in for the pretrained model.
    emb = 0.02 * jax.random.normal(key, (VOCAB, D_MODEL), dtype=jnp.float32)
    return {"emb": emb}


def sum_text_encoder_forward(params, input_ids, lengths):
    # TODO(synk): the full pretrained AutoModel transformer stack (and tokenizer) has no
    # in-script Pallas equivalent; hidden states are synthesized with a deterministic
    # embedding lookup standing in for extract_fn(model(...)).  The module's own forward
    # compute (masked sum over seq + L2 normalize) runs in the Pallas kernel.
    hidden = params["emb"][input_ids]                     # (B, S, D)
    return masked_sum_normalize(hidden, lengths)


if __name__ == "__main__":
    key = jax.random.PRNGKey(0)
    k_emb, k_ids = jax.random.split(key)

    params = init_params(k_emb)
    input_ids = jax.random.randint(k_ids, (BATCH, SEQ), 0, VOCAB, dtype=jnp.int32)
    # attention lengths: sample 0 is full length, sample 1 is half-padded
    lengths = jnp.array([SEQ, SEQ // 2], dtype=jnp.int32)

    y = sum_text_encoder_forward(params, input_ids, lengths)
    y = jax.block_until_ready(y)

    # Pure-JAX reference of the module's forward (post-model part).
    hidden_ref = params["emb"][input_ids]
    mask = (jnp.arange(SEQ)[None, :] < lengths[:, None]).astype(jnp.float32)
    masked = hidden_ref * mask[:, :, None]
    s = masked.sum(axis=1)
    y_ref = s / jnp.maximum(jnp.linalg.norm(s, axis=-1, keepdims=True), 1e-12)

    assert y.shape == (BATCH, D_MODEL)
    assert jnp.allclose(y, y_ref, atol=1e-5, rtol=1e-5)
    print("KERNEL_OK")
</pallas_src>

<mosaic_0001>
module attributes {stable_mosaic.version = 11 : i64} {
  func.func @_masked_sum_norm_kernel(%arg0: i32, %arg1: i32, %arg2: memref<2xi32, #tpu.memory_space<smem>>, %arg3: memref<2x8x768xf32, #tpu.memory_space<vmem>>, %arg4: memref<2x768xf32, #tpu.memory_space<vmem>>, %arg5: memref<2x768xf32, #tpu.memory_space<vmem>>) attributes {dimension_semantics = [#tpu.dimension_semantics<parallel>, #tpu.dimension_semantics<arbitrary>], iteration_bounds = array<i64: 1, 1>, scalar_prefetch = 1 : i64, scratch_operands = 1 : i64, tpu.core_type = #tpu.core_type<tc>, window_params = [{transform_indices = @transform_0, window_bounds = array<i64: 2, 8, 768>}, {transform_indices = @transform_1, window_bounds = array<i64: 2, 768>}]} {
    %c0_i32 = arith.constant 0 : i32
    %0 = arith.cmpi eq, %arg1, %c0_i32 : i32
    %1 = arith.extui %0 : i1 to i32
    %c0_i32_0 = arith.constant 0 : i32
    %2 = arith.cmpi ne, %1, %c0_i32_0 : i32
    scf.if %2 {
      %cst_15 = arith.constant 0.000000e+00 : f32
      %39 = vector.broadcast %cst_15 : f32 to vector<2x768xf32>
      %c0_16 = arith.constant 0 : index
      %c0_17 = arith.constant 0 : index
      %40 = vector.load %arg5[%c0_16, %c0_17] : memref<2x768xf32, #tpu.memory_space<vmem>>, vector<2x768xf32>
      tpu.vector_store %arg5[%c0_16, %c0_17], %39 {strides = array<i32>} : memref<2x768xf32, #tpu.memory_space<vmem>>, vector<2x768xf32>,
    } else {
    }
    %3 = tpu.iota {dimensions = array<i32: 0>} : vector<2x1x1xi32>
    %c0_i32_1 = arith.constant 0 : i32
    %4 = vector.broadcast %c0_i32_1 : i32 to vector<2x1x1xi32>
    %c0_i32_2 = arith.constant 0 : i32
    %5 = vector.broadcast %c0_i32_2 : i32 to vector<2x1x1xi32>
    %6 = arith.cmpi eq, %3, %5 : vector<2x1x1xi32>
    %c2_i32 = arith.constant 2 : i32
    %7 = arith.muli %arg0, %c2_i32 : i32
    %c0_i32_3 = arith.constant 0 : i32
    %8 = arith.addi %7, %c0_i32_3 : i32
    %9 = arith.index_cast %8 : i32 to index
    %10 = memref.load %arg2[%9] : memref<2xi32, #tpu.memory_space<smem>>
    %11 = vector.broadcast %10 : i32 to vector<2x1x1xi32>
    %12 = arith.select %6, %11, %4 : vector<2x1x1xi1>, vector<2x1x1xi32>
    %c1_i32 = arith.constant 1 : i32
    %13 = vector.broadcast %c1_i32 : i32 to vector<2x1x1xi32>
    %14 = arith.cmpi eq, %3, %13 : vector<2x1x1xi32>
    %c2_i32_4 = arith.constant 2 : i32
    %15 = arith.muli %arg0, %c2_i32_4 : i32
    %c1_i32_5 = arith.constant 1 : i32
    %16 = arith.addi %15, %c1_i32_5 : i32
    %17 = arith.index_cast %16 : i32 to index
    %18 = memref.load %arg2[%17] : memref<2xi32, #tpu.memory_space<smem>>
    %19 = vector.broadcast %18 : i32 to vector<2x1x1xi32>
    %20 = arith.select %14, %19, %12 : vector<2x1x1xi1>, vector<2x1x1xi32>
    %c8_i32 = arith.constant 8 : i32
    %21 = arith.muli %arg1, %c8_i32 : i32
    %22 = tpu.iota {dimensions = array<i32: 1>} : vector<2x8x1xi32>
    %23 = vector.broadcast %21 : i32 to vector<2x8x1xi32>
    %24 = arith.addi %23, %22 : vector<2x8x1xi32>
    %25 = vector.broadcast %20 : vector<2x1x1xi32> to vector<2x8x1xi32>
    %26 = arith.cmpi slt, %24, %25 : vector<2x8x1xi32>
    %c0 = arith.constant 0 : index
    %c0_6 = arith.constant 0 : index
    %c0_7 = arith.constant 0 : index
    %27 = vector.load %arg3[%c0, %c0_6, %c0_7] : memref<2x8x768xf32, #tpu.memory_space<vmem>>, vector<2x8x768xf32>
    %cst = arith.constant 0.000000e+00 : f32
    %28 = vector.shape_cast %26 : vector<2x8x1xi1> to vector<2x8x1xi1>
    %29 = vector.broadcast %28 : vector<2x8x1xi1> to vector<2x8x768xi1>
    %30 = vector.broadcast %cst : f32 to vector<2x8x768xf32>
    %31 = arith.select %29, %27, %30 : vector<2x8x768xi1>, vector<2x8x768xf32>
    %c0_8 = arith.constant 0 : index
    %c0_9 = arith.constant 0 : index
    %32 = vector.load %arg5[%c0_8, %c0_9] : memref<2x768xf32, #tpu.memory_space<vmem>>, vector<2x768xf32>
    %cst_10 = arith.constant dense<0.000000e+00> : vector<2x768xf32>
    %33 = vector.multi_reduction <add>, %31, %cst_10 [1] : vector<2x8x768xf32> to vector<2x768xf32>
    %34 = arith.addf %32, %33 : vector<2x768xf32>
    %c0_11 = arith.constant 0 : index
    %c0_12 = arith.constant 0 : index
    %35 = vector.load %arg5[%c0_11, %c0_12] : memref<2x768xf32, #tpu.memory_space<vmem>>, vector<2x768xf32>
    tpu.vector_store %arg5[%c0_11, %c0_12], %34 {strides = array<i32>} : memref<2x768xf32, #tpu.memory_space<vmem>>, vector<2x768xf32>,
    %c0_i32_13 = arith.constant 0 : i32
    %36 = arith.cmpi eq, %arg1, %c0_i32_13 : i32
    %37 = arith.extui %36 : i1 to i32
    %c0_i32_14 = arith.constant 0 : i32
    %38 = arith.cmpi ne, %37, %c0_i32_14 : i32
    scf.if %38 {
      %c0_15 = arith.constant 0 : index
      %c0_16 = arith.constant 0 : index
      %39 = vector.load %arg5[%c0_15, %c0_16] : memref<2x768xf32, #tpu.memory_space<vmem>>, vector<2x768xf32>
      %40 = arith.mulf %39, %39 : vector<2x768xf32>
      %cst_17 = arith.constant dense<0.000000e+00> : vector<2xf32>
      %41 = vector.multi_reduction <add>, %40, %cst_17 [1] : vector<2x768xf32> to vector<2xf32>
      %42 = vector.shape_cast %41 : vector<2xf32> to vector<2x1xf32>
      %cst_18 = arith.constant 1.000000e-24 : f32
      %43 = vector.broadcast %cst_18 : f32 to vector<2x1xf32>
      %44 = arith.maximumf %42, %43 : vector<2x1xf32>
      %45 = math.rsqrt %44 : vector<2x1xf32>
      %46 = vector.broadcast %45 : vector<2x1xf32> to vector<2x768xf32>
      %47 = arith.mulf %39, %46 : vector<2x768xf32>
      %c0_19 = arith.constant 0 : index
      %c0_20 = arith.constant 0 : index
      %48 = vector.load %arg4[%c0_19, %c0_20] : memref<2x768xf32, #tpu.memory_space<vmem>>, vector<2x768xf32>
      tpu.vector_store %arg4[%c0_19, %c0_20], %47 {strides = array<i32>} : memref<2x768xf32, #tpu.memory_space<vmem>>, vector<2x768xf32>,
    } else {
    }
    return
  }
  func.func @transform_0(%arg0: i32, %arg1: i32, %arg2: memref<2xi32, #tpu.memory_space<smem>>) -> (i32, i32, i32) {
    %c0_i32 = arith.constant 0 : i32
    %c0_i32_0 = arith.constant 0 : i32
    return %arg0, %arg1, %c0_i32 : i32, i32, i32
  }
  func.func @transform_1(%arg0: i32, %arg1: i32, %arg2: memref<2xi32, #tpu.memory_space<smem>>) -> (i32, i32) {
    %c0_i32 = arith.constant 0 : i32
    %c0_i32_0 = arith.constant 0 : i32
    return %arg0, %c0_i32 : i32, i32
  }
}

</mosaic_0001>

<llo_original>
// kernel: tpu_custom_call.1
$region0: #{tpu_custom_call.1}
  #allocation0 [shape = 'u32[]', space=smem, size = 0x4, offset = 0x4, fixed_abs, tag = 'smem constant byte address 0x4 - core index']
  #allocation1 [shape = 'u32[144,128]{1,0:T(1,128)}', space=vmem, size = 0x12000, scoped, tag = 'internal scratch']
  #allocation2 [shape = 'f32[2,768]{1,0:T(2,128)}', space=vmem, size = 0x1800, scoped, tag = 'scratch operand']
  #allocation3 [shape = 's32[1]{0}', space=sflag, size = 0x4, scoped, tag = 'scoped memory for tpu_custom_call.1']
  #allocation4 [shape = 'u8[512]{0}', space=smem, size = 0x200, scoped, tag = 'prefetched SMEM operand 0']
  %s0 = inlined_call_operand.hbm [shape: s32[2], index: 0, kind: input, shape index: {}]
  %s1 = inlined_call_operand.hbm [shape: f32[2,8,768], index: 1, kind: input, shape index: {}]
  %s2 = inlined_call_operand.hbm [shape: f32[2,768], index: 2, kind: output, shape index: {}]
  %s3 = sld [smem:[#allocation0]]
  $region26: #{tpu_custom_call.1} parent=0
    _
  %s5 = ssub.s32 1, %s3
  %s6 = scalar_select 0, %s5, %s3
  %8 = dma.hbm_to_smem %s0, 16, [#allocation4], [#allocation3]
  %9 = dma.done [#allocation3], 16
  %10 = sfence
  $region1: #{tpu_custom_call.1} parent=0
    #allocation5 [shape = 'u8[49152]{0}', space=vmem, size = 0xc000, scoped, tag = 'input window, operand 1, single buffered']
    #allocation6 [shape = 's32[1]{0}', space=sflag, size = 0x4, scoped, tag = 'scoped memory for tpu_custom_call.1']
    #allocation7 [shape = 's32[1]{0}', space=sflag, size = 0x4, scoped, tag = 'scoped memory for tpu_custom_call.1']
    #allocation8 [shape = 'u8[6144]{0}', space=vmem, size = 0x1800, scoped, tag = 'output window, operand 0, single buffered']
    %11 = vsyncpa [#allocation6], 0
    %12 = vsyncpa [#allocation7], 0
    // Predicated region
    $region2: #{tpu_custom_call.1} parent=1 // pred_check
      _
    $region3: #{tpu_custom_call.1} parent=1 // pred_check_branch
      %14 = sbr.rel (0) target = $region5
    $region4: #{tpu_custom_call.1} parent=1 // pred_region
      %s16 = ssub.s32 1536, 1536
      %17 = vsyncadd [#allocation6], %s16
      %s18 = sshll.u32 [#allocation5], 4
      %s19 = int_to_ptr.vmem [resolvable:$true] %s18
      %24 = dma.hbm_to_vmem [thread:$0]  %s1, 1536, %s19, [#allocation6], 768, 768, 48
    $region5: #{tpu_custom_call.1} parent=1 // pred_fallthru
      _
    // Predicated region
    $region6: #{tpu_custom_call.1} parent=1 // pred_check
      _
    $region7: #{tpu_custom_call.1} parent=1 // pred_check_branch
      %26 = sbr.rel (0) target = $region9
    $region8: #{tpu_custom_call.1} parent=1 // pred_region
      %27 = dma.done [#allocation6], 1536
    $region9: #{tpu_custom_call.1} parent=1 // pred_fallthru
      _
    %p28 = scmp.eq.s32.totalorder 0, 0
    // Predicated region
    $region10: #{tpu_custom_call.1} parent=1 // pred_check
      %p29 = pneg %p28
    $region11: #{tpu_custom_call.1} parent=1 // pred_check_branch
      %31 = sbr.rel (%p29) target = $region13
    $region12: #{tpu_custom_call.1} parent=1 // pred_region
      %32 = vst [vmem:[#allocation2] sm:$0xff] 0.0
      %33 = vst [vmem:[#allocation2 + $0x8] sm:$0xf] 0.0
    $region13: #{tpu_custom_call.1} parent=1 // pred_fallthru
      _
    %s34 = smul.u32 0, 2
    %s35 = sld [smem:[#allocation4 + %s34]]
    %v36 = vstv %s35
    %s37 = sadd.s32 %s34, 1
    %s38 = sld [smem:[#allocation4 + %s37]]
    %v39 = vstv %s38
    %s40 = smul.u32 0, 8
    %v41 = vlaneseq
    %v42 = vshrl.u32 %v41, 7
    %v43 = vstv %s40
    %v44 = vadd.s32 %v43, %v42
    %vm45 = vcmp.lt.s32.totalorder %v44, %v36
    %vm46 = vcmp.lt.s32.totalorder %v44, %v39
    %v47 = vld [vmem:[#allocation5] sm:$0xff]
    %v48 = vld [vmem:[#allocation5 + $0x8] sm:$0xff]
    %v49 = vld [vmem:[#allocation5 + $0x10] sm:$0xff]
    %v50 = vld [vmem:[#allocation5 + $0x18] sm:$0xff]
    %v51 = vld [vmem:[#allocation5 + $0x20] sm:$0xff]
    %v52 = vld [vmem:[#allocation5 + $0x28] sm:$0xff]
    %v53 = vld [vmem:[#allocation5 + $0x30] sm:$0xff]
    %v54 = vld [vmem:[#allocation5 + $0x38] sm:$0xff]
    %v55 = vld [vmem:[#allocation5 + $0x40] sm:$0xff]
    %v56 = vld [vmem:[#allocation5 + $0x48] sm:$0xff]
    %v57 = vld [vmem:[#allocation5 + $0x50] sm:$0xff]
    %v58 = vld [vmem:[#allocation5 + $0x58] sm:$0xff]
    %v59 = vsel %vm45, 1, 0
    %v60 = vsel %vm46, 1, 0
    %vm61 = vcmp.eq.s32.totalorder %v59, 1
    %vm62 = vcmp.eq.s32.totalorder %v60, 1
    %v63 = vsel %vm61, %v47, 0.0
    %v64 = vsel %vm61, %v48, 0.0
    %v65 = vsel %vm61, %v49, 0.0
    %v66 = vsel %vm61, %v50, 0.0
    %v67 = vsel %vm61, %v51, 0.0
    %v68 = vsel %vm61, %v52, 0.0
    %v69 = vsel %vm62, %v53, 0.0
    %v70 = vsel %vm62, %v54, 0.0
    %v71 = vsel %vm62, %v55, 0.0
    %v72 = vsel %vm62, %v56, 0.0
    %v73 = vsel %vm62, %v57, 0.0
    %v74 = vsel %vm62, %v58, 0.0
    %v75 = vld [vmem:[#allocation2] sm:$0xff]
    %v76 = vld [vmem:[#allocation2 + $0x8] sm:$0xf]
    %v77 = vrot.slane %v63, 4
    %v78 = vadd.f32 %v63, %v77
    %v79 = vrot.slane %v78, 2
    %v80 = vadd.f32 %v78, %v79
    %v81 = vrot.slane %v80, 1
    %v82 = vadd.f32 %v80, %v81
    %v83 = vrot.slane %v64, 4
    %v84 = vadd.f32 %v64, %v83
    %v85 = vrot.slane %v84, 2
    %v86 = vadd.f32 %v84, %v85
    %v87 = vrot.slane %v86, 1
    %v88 = vadd.f32 %v86, %v87
    %v89 = vrot.slane %v65, 4
    %v90 = vadd.f32 %v65, %v89
    %v91 = vrot.slane %v90, 2
    %v92 = vadd.f32 %v90, %v91
    %v93 = vrot.slane %v92, 1
    %v94 = vadd.f32 %v92, %v93
    %v95 = vrot.slane %v66, 4
    %v96 = vadd.f32 %v66, %v95
    %v97 = vrot.slane %v96, 2
    %v98 = vadd.f32 %v96, %v97
    %v99 = vrot.slane %v98, 1
    %v100 = vadd.f32 %v98, %v99
    %v101 = vrot.slane %v67, 4
    %v102 = vadd.f32 %v67, %v101
    %v103 = vrot.slane %v102, 2
    %v104 = vadd.f32 %v102, %v103
    %v105 = vrot.slane %v104, 1
    %v106 = vadd.f32 %v104, %v105
    %v107 = vrot.slane %v68, 4
    %v108 = vadd.f32 %v68, %v107
    %v109 = vrot.slane %v108, 2
    %v110 = vadd.f32 %v108, %v109
    %v111 = vrot.slane %v110, 1
    %v112 = vadd.f32 %v110, %v111
    %v113 = vrot.slane %v69, 4
    %v114 = vadd.f32 %v69, %v113
    %v115 = vrot.slane %v114, 2
    %v116 = vadd.f32 %v114, %v115
    %v117 = vrot.slane %v116, 1
    %v118 = vadd.f32 %v116, %v117
    %v119 = vrot.slane %v70, 4
    %v120 = vadd.f32 %v70, %v119
    %v121 = vrot.slane %v120, 2
    %v122 = vadd.f32 %v120, %v121
    %v123 = vrot.slane %v122, 1
    %v124 = vadd.f32 %v122, %v123
    %v125 = vrot.slane %v71, 4
    %v126 = vadd.f32 %v71, %v125
    %v127 = vrot.slane %v126, 2
    %v128 = vadd.f32 %v126, %v127
    %v129 = vrot.slane %v128, 1
    %v130 = vadd.f32 %v128, %v129
    %v131 = vrot.slane %v72, 4
    %v132 = vadd.f32 %v72, %v131
    %v133 = vrot.slane %v132, 2
    %v134 = vadd.f32 %v132, %v133
    %v135 = vrot.slane %v134, 1
    %v136 = vadd.f32 %v134, %v135
    %v137 = vrot.slane %v73, 4
    %v138 = vadd.f32 %v73, %v137
    %v139 = vrot.slane %v138, 2
    %v140 = vadd.f32 %v138, %v139
    %v141 = vrot.slane %v140, 1
    %v142 = vadd.f32 %v140, %v141
    %v143 = vrot.slane %v74, 4
    %v144 = vadd.f32 %v74, %v143
    %v145 = vrot.slane %v144, 2
    %v146 = vadd.f32 %v144, %v145
    %v147 = vrot.slane %v146, 1
    %v148 = vadd.f32 %v146, %v147
    %v161 = vcombine.low %v82, %v88
    %v162 = vcombine.low %v94, %v100
    %v164 = vunpack.c.l.s4 1983009808
    %v165 = vunpack.c.0.s8 %v164
    %v166 = vlaneseq
    %v167 = vshrl.u32 %v166, 7
    %v168 = vsub.s32 %v165, %v167
    %v169 = vrot.slane %v161, %v168
    %v171 = vunpack.c.l.s4 1983009808
    %v172 = vunpack.c.0.s8 %v171
    %v173 = vlaneseq
    %v174 = vshrl.u32 %v173, 7
    %v175 = vsub.s32 %v172, %v174
    %v176 = vrot.slane %v162, %v175
    %v177 = vcombine.low %v169, %v176
    %v178 = vcombine.low %v106, %v112
    %v180 = vunpack.c.l.s4 1983009808
    %v181 = vunpack.c.0.s8 %v180
    %v182 = vlaneseq
    %v183 = vshrl.u32 %v182, 7
    %v184 = vsub.s32 %v181, %v183
    %v185 = vrot.slane %v178, %v184
    %v186 = vcombine.low %v118, %v124
    %v187 = vcombine.low %v130, %v136
    %v189 = vunpack.c.l.s4 1983009808
    %v190 = vunpack.c.0.s8 %v189
    %v191 = vlaneseq
    %v192 = vshrl.u32 %v191, 7
    %v193 = vsub.s32 %v190, %v192
    %v194 = vrot.slane %v186, %v193
    %v196 = vunpack.c.l.s4 1983009808
    %v197 = vunpack.c.0.s8 %v196
    %v198 = vlaneseq
    %v199 = vshrl.u32 %v198, 7
    %v200 = vsub.s32 %v197, %v199
    %v201 = vrot.slane %v187, %v200
    %v202 = vcombine.low %v194, %v201
    %v203 = vcombine.low %v142, %v148
    %v205 = vunpack.c.l.s4 1983009808
    %v206 = vunpack.c.0.s8 %v205
    %v207 = vlaneseq
    %v208 = vshrl.u32 %v207, 7
    %v209 = vsub.s32 %v206, %v208
    %v210 = vrot.slane %v203, %v209
    %vm211 = vcmask 1044484
    %v212 = vsel %vm211, %v177, %v177
    %vm213 = vcmask 1046534
    %v214 = vsel %vm213, %v177, %v212
    %v215 = vrot.slane %v202, 7
    %vm216 = vcmask 1041409
    %v217 = vsel %vm216, %v215, %v214
    %vm218 = vcmask 1043459
    %v219 = vsel %vm218, %v215, %v217
    %vm220 = vcmask 1045509
    %v221 = vsel %vm220, %v215, %v219
    %vm222 = vcmask 1047559
    %v223 = vsel %vm222, %v215, %v221
    %v224 = vsel %vm211, %v185, %v185
    %v225 = vsel %vm213, %v185, %v224
    %v226 = vrot.slane %v210, 7
    %v227 = vsel %vm216, %v226, %v225
    %v228 = vsel %vm218, %v226, %v227
    %v229 = vsel %vm220, %v226, %v228
    %v230 = vsel %vm222, %v226, %v229
    %v233 = vadd.f32 %v75, %v223
    %v234 = vadd.f32 %v76, %v230
    %235 = vst [vmem:[#allocation2] sm:$0xff] %v233
    %236 = vst [vmem:[#allocation2 + $0x8] sm:$0xf] %v234
    // Predicated region
    $region14: #{tpu_custom_call.1} parent=1 // pred_check
      %p237 = pneg %p28
    $region15: #{tpu_custom_call.1} parent=1 // pred_check_branch
      %239 = sbr.rel (%p237) target = $region17
    $region16: #{tpu_custom_call.1} parent=1 // pred_region
      %v240 = vld [vmem:[#allocation2] sm:$0xff]
      %v241 = vld [vmem:[#allocation2 + $0x8] sm:$0xf]
      %v242 = vmul.f32 %v240, %v240
      %v243 = vmul.f32 %v241, %v241
      %v246 = vcombine.high %v242, %v242
      %v248 = vunpack.c.l.s4 1983009808
      %v249 = vunpack.c.0.s8 %v248
      %v250 = vlaneseq
      %v251 = vshrl.u32 %v250, 7
      %v252 = vsub.s32 %v249, %v251
      %v253 = vrot.slane %v242, %v252
      %v255 = vunpack.c.l.s4 1983009808
      %v256 = vunpack.c.0.s8 %v255
      %v257 = vlaneseq
      %v258 = vshrl.u32 %v257, 7
      %v259 = vsub.s32 %v256, %v258
      %v260 = vrot.slane %v246, %v259
      %v261 = vcombine.high %v253, %v253
      %v262 = vcombine.high %v260, %v260
      %v264 = vunpack.c.l.s4 1983009808
      %v265 = vunpack.c.0.s8 %v264
      %v266 = vlaneseq
      %v267 = vshrl.u32 %v266, 7
      %v268 = vsub.s32 %v265, %v267
      %v269 = vrot.slane %v243, %v268
      %v270 = vcombine.high %v269, %v269
      %vm277 = vcmask 1041408
      %v278 = vsel %vm277, %v253, 0.0
      %v279 = vsel %vm277, %v261, 0.0
      %v280 = vadd.f32 %v278, %v279
      %v281 = vsel %vm277, %v260, 0.0
      %v282 = vadd.f32 %v280, %v281
      %v283 = vsel %vm277, %v262, 0.0
      %v284 = vadd.f32 %v282, %v283
      %v285 = vsel %vm277, %v269, 0.0
      %v286 = vadd.f32 %v284, %v285
      %v287 = vsel %vm277, %v270, 0.0
      %v288 = vadd.f32 %v286, %v287
      %289 = vadd.xlane.f32.xlu0 %v288
      %v290 = vpop.xlane.xlu0 %289
      %v291 = vmax.f32 %v290, 1e-24
      %v292 = vrsqrt.pop %v291
      %v295 = vunpack.c.l.s4 269488144
      %v296 = vunpack.c.0.s8 %v295
      %v297 = vlaneseq
      %v298 = vshrl.u32 %v297, 7
      %v299 = vsub.s32 %v296, %v298
      %v300 = vrot.slane %v292, %v299
      %v302 = vmul.f32 %v240, %v300
      %v303 = vmul.f32 %v241, %v300
      %304 = vst [vmem:[#allocation8] sm:$0xff] %v302
      %305 = vst [vmem:[#allocation8 + $0x8] sm:$0xf] %v303
    $region17: #{tpu_custom_call.1} parent=1 // pred_fallthru
      _
    // Predicated region
    $region18: #{tpu_custom_call.1} parent=1 // pred_check
      _
    $region19: #{tpu_custom_call.1} parent=1 // pred_check_branch
      %307 = sbr.rel (0) target = $region21
    $region20: #{tpu_custom_call.1} parent=1 // pred_region
      %s309 = ssub.s32 192, 192
      %310 = vsyncadd [#allocation7], %s309
      %s312 = sshll.u32 [#allocation8], 4
      %s313 = int_to_ptr.vmem [resolvable:$true] %s312
      %315 = dma.vmem_to_hbm [thread:$0]  %s313, 192, %s2, [#allocation7]
    $region21: #{tpu_custom_call.1} parent=1 // pred_fallthru
      _
    // Predicated region
    $region22: #{tpu_custom_call.1} parent=1 // pred_check
      _
    $region23: #{tpu_custom_call.1} parent=1 // pred_check_branch
      %317 = sbr.rel (0) target = $region25
    $region24: #{tpu_custom_call.1} parent=1 // pred_region
      %318 = dma.done [#allocation7], 192
    $region25: #{tpu_custom_call.1} parent=1 // pred_fallthru
      _
    %319 = vsyncpa [#allocation6], 1
    %320 = vsyncpa [#allocation7], 1

</llo_original>
